<compile_context>
chip_gen: v5e
topology: v5e:2x2
jax: 0.10.0
libtpu: 0.0.40
codegen_flags: <defaults>
</compile_context>

<pallas_src>
import numpy as np
import jax
import jax.numpy as jnp
from jax import lax
from jax.experimental import pallas as pl
from jax.experimental.pallas import tpu as pltpu

_LANE = 128
_SUBLANE = 8
_MIB = 1024 * 1024


def _round_up(n, m):
    return ((n + m - 1) // m) * m


def _vmem_capacity_bytes():
    """Per-TensorCore VMEM capacity (generation aware); conservative fallback."""
    try:
        cap = int(pltpu.get_tpu_info().vmem_capacity_bytes)
        if cap > 0:
            return cap
    except Exception:
        pass
    return 64 * _MIB  # v7x per-TC value; conservative for v5e/v6e (128 MiB)


# ----------------------------------------------------------------------------
# Pallas kernels
# ----------------------------------------------------------------------------
def _eraser_kernel_resident(x_ref, bias_ref, pt_ref, o_ref):
    """out = x @ P.T + bias.  P.T and bias stay VMEM-resident across row tiles.
    x is cast to the compute dtype in-register (no wrapper-side cast pass)."""
    x = x_ref[...]
    pt = pt_ref[...]
    if x.dtype != pt.dtype:
        x = x.astype(pt.dtype)
    y = lax.dot_general(
        x, pt, dimension_numbers=(((1,), (0,)), ((), ())),
        preferred_element_type=jnp.float32)
    o_ref[...] = (y + bias_ref[...]).astype(o_ref.dtype)


def _eraser_kernel_ktiled(x_ref, bias_ref, pt_ref, o_ref, acc_ref):
    """Large-D fallback: K-tiled accumulation over grid axis 2."""
    @pl.when(pl.program_id(2) == 0)
    def _():
        acc_ref[...] = jnp.zeros_like(acc_ref)

    x = x_ref[...]
    pt = pt_ref[...]
    if x.dtype != pt.dtype:
        x = x.astype(pt.dtype)
    acc_ref[...] += lax.dot_general(
        x, pt, dimension_numbers=(((1,), (0,)), ((), ())),
        preferred_element_type=jnp.float32)

    @pl.when(pl.program_id(2) == pl.num_programs(2) - 1)
    def _():
        o_ref[...] = (acc_ref[...] + bias_ref[...]).astype(o_ref.dtype)


# ----------------------------------------------------------------------------
# pallas_call wrappers
# ----------------------------------------------------------------------------
def _call_resident(x_in, bias_pad, pt_pad, *, n, dp, tm, out_dtype, vmem_limit,
                   cost, single_buffer_consts):
    const_kwargs = {"pipeline_mode": pl.Buffered(1)} if single_buffer_consts else {}
    return pl.pallas_call(
        _eraser_kernel_resident,
        out_shape=jax.ShapeDtypeStruct((n, dp), out_dtype),
        grid_spec=pltpu.PrefetchScalarGridSpec(
            num_scalar_prefetch=0,
            grid=(pl.cdiv(n, tm),),
            in_specs=[
                pl.BlockSpec((tm, dp), lambda i: (i, 0)),                  # x (streamed)
                pl.BlockSpec((1, dp), lambda i: (0, 0), **const_kwargs),   # bias (resident)
                pl.BlockSpec((dp, dp), lambda i: (0, 0), **const_kwargs),  # P.T (resident)
            ],
            out_specs=pl.BlockSpec((tm, dp), lambda i: (i, 0)),
        ),
        compiler_params=pltpu.CompilerParams(
            dimension_semantics=("parallel",),
            vmem_limit_bytes=int(vmem_limit)),
        cost_estimate=cost,
    )(x_in, bias_pad, pt_pad)


def _call_ktiled(x_in, bias_pad, pt_pad, *, n, dp, tm, tn, tk, out_dtype,
                 vmem_limit, cost):
    return pl.pallas_call(
        _eraser_kernel_ktiled,
        out_shape=jax.ShapeDtypeStruct((n, dp), out_dtype),
        grid_spec=pltpu.PrefetchScalarGridSpec(
            num_scalar_prefetch=0,
            grid=(pl.cdiv(n, tm), dp // tn, dp // tk),
            in_specs=[
                pl.BlockSpec((tm, tk), lambda i, j, k: (i, k)),   # x
                pl.BlockSpec((1, tn), lambda i, j, k: (0, j)),    # bias
                pl.BlockSpec((tk, tn), lambda i, j, k: (k, j)),   # P.T
            ],
            out_specs=pl.BlockSpec((tm, tn), lambda i, j, k: (i, j)),
            scratch_shapes=[pltpu.VMEM((tm, tn), jnp.float32)],
        ),
        compiler_params=pltpu.CompilerParams(
            dimension_semantics=("parallel", "parallel", "arbitrary"),
            vmem_limit_bytes=int(vmem_limit)),
        cost_estimate=cost,
    )(x_in, bias_pad, pt_pad)


# ----------------------------------------------------------------------------
# One-time constant prep (hoisted out of the per-call path)
# ----------------------------------------------------------------------------
def prepare_concept_eraser(mean_x, P, *, affine=True, compute_dtype=jnp.float32):
    """Pre-transpose P, fold the affine centering into a bias, identity-pad the
    feature dim to a lane multiple when needed, and cast P.T to the compute
    dtype.  Cache / reuse the returned params across forward calls.

    compute_dtype=bfloat16 halves P/x HBM bytes (worthwhile on v5e/v6e/v7x when
    bandwidth bound) but slightly perturbs the exact-erasure guarantee; keep
    float32 if erasure fidelity is critical.
    """
    P = jnp.asarray(P, jnp.float32)
    d = int(P.shape[0])
    dp = max(_round_up(d, _LANE), _LANE)
    pt = P.T
    if affine:
        mu = jnp.asarray(mean_x, jnp.float32).reshape(1, d)
        bias = mu - mu @ pt                     # fold centering into a bias
    else:
        bias = jnp.zeros((1, d), jnp.float32)

    if dp == d:
        pt_pad = pt.astype(compute_dtype)
        bias_pad = bias
    else:
        pt_pad = jnp.eye(dp, dtype=compute_dtype).at[:d, :d].set(
            pt.astype(compute_dtype))
        bias_pad = jnp.zeros((1, dp), jnp.float32).at[:, :d].set(bias)

    return {"pt": pt_pad, "bias": bias_pad, "d": d, "dp": dp,
            "compute_dtype": jnp.dtype(compute_dtype)}


# ----------------------------------------------------------------------------
# Forward pass
# ----------------------------------------------------------------------------
def concept_eraser_apply(x, params, *, force_ktiled=False):
    """Apply the (pre-prepared) ConceptEraser projection: out = x @ P.T + bias."""
    pt_pad = params["pt"]
    bias_pad = params["bias"]
    d = int(params["d"])
    dp = int(params["dp"])
    compute_dtype = params["compute_dtype"]

    orig_shape = x.shape
    out_dtype = x.dtype
    assert orig_shape[-1] == d, f"expected trailing dim {d}, got {orig_shape[-1]}"
    x2 = x.reshape(-1, d)
    n = int(x2.shape[0])

    if dp == d:
        # Common case (d % 128 == 0): no wrapper-side pad/cast pass over x.
        x_in = x2
    else:
        # Rare case: feature dim must be lane-padded; cast while copying.
        x_in = jnp.zeros((n, dp), compute_dtype).at[:, :d].set(
            x2.astype(compute_dtype))

    x_item = jnp.dtype(x_in.dtype).itemsize
    out_item = jnp.dtype(out_dtype).itemsize
    p_item = jnp.dtype(pt_pad.dtype).itemsize
    p_bytes = dp * dp * p_item
    bias_bytes = dp * 4

    vmem_cap = _vmem_capacity_bytes()
    safe_cap = vmem_cap - 8 * _MIB          # headroom for compiler scratch
    resident_budget = (vmem_cap * 3) // 8   # ~24 MiB on v7x, ~48 MiB on v5e/v6e

    def tiles_a(tm):  # double-buffered streamed x + out tiles
        return 2 * tm * dp * (x_item + out_item)

    use_resident = (
        (not force_ktiled)
        and p_bytes <= resident_budget
        # even if the constants end up double-buffered, the smallest tiling fits
        and (2 * p_bytes + tiles_a(_SUBLANE) + 2 * bias_bytes) <= safe_cap
    )

    if use_resident:
        # ---------------- Path A: resident P.T, row-streamed x/out ----------
        tm = min(512, _round_up(max(n, 1), _SUBLANE))
        if n >= 2 * _SUBLANE:
            # >= 2 row tiles so both v7x TensorCores get work / pipeline overlaps
            tm = min(tm, _round_up((n + 1) // 2, _SUBLANE))
        while tm > _SUBLANE and (2 * p_bytes + tiles_a(tm) + 2 * bias_bytes) > safe_cap:
            tm = max(_SUBLANE, _round_up(tm // 2, _SUBLANE))

        cost = pl.CostEstimate(
            flops=2 * n * dp * dp, transcendentals=0,
            bytes_accessed=int(n * dp * (x_item + out_item) + p_bytes + bias_bytes))
        vmem_limit = min(safe_cap,
                         max(2 * p_bytes + tiles_a(tm) + 2 * bias_bytes + 4 * _MIB,
                             32 * _MIB))
        try:
            out = _call_resident(x_in, bias_pad, pt_pad, n=n, dp=dp, tm=tm,
                                 out_dtype=out_dtype, vmem_limit=vmem_limit,
                                 cost=cost, single_buffer_consts=True)
        except Exception:
            # pipeline_mode=pl.Buffered(1) unsupported on this jax version; the
            # VMEM budget above already accounts for double-buffered constants.
            out = _call_resident(x_in, bias_pad, pt_pad, n=n, dp=dp, tm=tm,
                                 out_dtype=out_dtype, vmem_limit=vmem_limit,
                                 cost=cost, single_buffer_consts=False)
    else:
        # ---------------- Path B: large D -> K-tiled accumulation -----------
        if dp % 512 == 0:
            tn = tk = 512          # full 2x256^2 MXU utilization on v6e/v7x
        elif dp % 256 == 0:
            tn = tk = 256
        else:
            tn = tk = _LANE
        tm = min(512, _round_up(max(n, 1), _SUBLANE))
        if n >= 2 * _SUBLANE:
            tm = min(tm, _round_up((n + 1) // 2, _SUBLANE))

        def tiles_b(tm_):
            return (2 * tm_ * tk * x_item + 2 * tk * tn * p_item
                    + 2 * tm_ * tn * out_item + tm_ * tn * 4 + 2 * tn * 4)

        while tm > _SUBLANE and tiles_b(tm) > safe_cap:
            tm = max(_SUBLANE, _round_up(tm // 2, _SUBLANE))

        n_row_tiles = pl.cdiv(n, tm)
        cost = pl.CostEstimate(
            flops=2 * n * dp * dp, transcendentals=0,
            bytes_accessed=int(n * dp * x_item * (dp // tn)
                               + p_bytes * n_row_tiles
                               + n * dp * out_item + bias_bytes))
        vmem_limit = min(safe_cap, max(tiles_b(tm) + 4 * _MIB, 32 * _MIB))
        out = _call_ktiled(x_in, bias_pad, pt_pad, n=n, dp=dp, tm=tm, tn=tn,
                           tk=tk, out_dtype=out_dtype, vmem_limit=vmem_limit,
                           cost=cost)
        # TODO(synk): for N >> D on Path B, a column-panel-resident (dp, tn)
        # layout or emit_pipeline two-level blocking would cut P refetch further.

    if dp != d:
        out = out[:, :d]
    return out.reshape(orig_shape)


def concept_eraser_forward(x, mean_x, P, *, affine=True,
                           compute_dtype=jnp.float32):
    """Convenience wrapper.  Prefer prepare_concept_eraser(...) once +
    concept_eraser_apply(...) per call: this redoes the constant prep (an extra
    full HBM pass over P) on every invocation."""
    params = prepare_concept_eraser(mean_x, P, affine=affine,
                                    compute_dtype=compute_dtype)
    return concept_eraser_apply(x, params)


# ----------------------------------------------------------------------------
# Parameter / statistics setup (mirrors ConceptEraser.update + ConceptEraser.P
# for method="leace", affine=True, constrain_cov_trace=True). Plain numpy.
# TODO(synk): SVD / eigh have no Pallas equivalent; this one-time fit stays on host.
# ----------------------------------------------------------------------------
def fit_leace_stats(x_fit, z_fit, svd_tol=0.01, constrain_cov_trace=True):
    x = np.asarray(x_fit, dtype=np.float64)
    z = np.asarray(z_fit, dtype=np.float64)
    n, d = x.shape
    _, k = z.shape

    mean_x = np.zeros(d)
    n_x = float(n)
    delta_x = x - mean_x
    mean_x = mean_x + delta_x.sum(axis=0) / n_x
    delta_x2 = x - mean_x
    x_M2 = delta_x.T @ delta_x2

    mean_z = np.zeros(k)
    n_z = float(n)
    delta_z = z - mean_z
    mean_z = mean_z + delta_z.sum(axis=0) / n_x
    delta_z2 = z - mean_z
    sigma_xz_M2 = delta_x.T @ delta_z2

    cov_x = x_M2 / (n_x - 1.0)
    cov_x = (cov_x + cov_x.T) / 2.0
    sigma_xz = sigma_xz_M2 / (n_z - 1.0)

    eye = np.eye(d)
    u, s, _ = np.linalg.svd(sigma_xz, full_matrices=False)
    mask = s > svd_tol
    if not mask.any():
        P = eye
    else:
        u = u[:, mask]
        Q = eye - u @ u.T
        A = Q @ cov_x @ Q
        L, V = np.linalg.eigh(A)
        L_inv = np.where(L > svd_tol, 1.0 / L, 0.0)
        P = cov_x @ V @ np.diag(L_inv) @ V.T

        old_trace = np.trace(cov_x)
        new_trace = np.trace(P @ cov_x @ P.T)
        if constrain_cov_trace and new_trace > old_trace:
            xx = new_trace
            yy = 2.0 * np.trace(P @ cov_x @ Q.T)
            zz = np.trace(Q @ cov_x @ Q.T)
            ww = old_trace
            discr = np.sqrt(4 * ww * xx - 4 * ww * yy + 4 * ww * zz
                            - 4 * xx * zz + yy ** 2)
            alpha1 = (-yy / 2 + zz - discr / 2) / (xx - yy + zz)
            alpha2 = (-yy / 2 + zz + discr / 2) / (xx - yy + zz)
            alpha = alpha1 if alpha1 > 0 else alpha2
            alpha = float(np.clip(alpha, 0.0, 1.0))
            P = alpha * P + (1.0 - alpha) * Q

    return (mean_x.astype(np.float32), P.astype(np.float32))


# ----------------------------------------------------------------------------
if __name__ == "__main__":
    key = jax.random.PRNGKey(0)
    ks = jax.random.split(key, 12)

    # ---- Test 1: d=32 (feature-padded to 128 lanes), f32, convenience API --
    X_DIM, Z_DIM, N_FIT, BATCH = 32, 4, 64, 8
    x_fit = jax.random.normal(ks[0], (N_FIT, X_DIM), dtype=jnp.float32)
    z_fit = jax.random.normal(ks[1], (N_FIT, Z_DIM), dtype=jnp.float32)
    mean_np, P_np = fit_leace_stats(np.array(x_fit), np.array(z_fit))
    x = jax.random.normal(ks[2], (BATCH, X_DIM), dtype=jnp.float32)
    out = jax.block_until_ready(
        concept_eraser_forward(x, jnp.asarray(mean_np), jnp.asarray(P_np)))
    x64 = np.asarray(x, np.float64)
    ref = (x64 - mean_np.astype(np.float64)[None]) @ P_np.astype(np.float64).T \
        + mean_np.astype(np.float64)[None]
    np.testing.assert_allclose(np.asarray(out, np.float64), ref,
                               rtol=1e-4, atol=1e-4)

    # ---- Test 2: d=128 (no pad / no wrapper copy), ragged row tiles (n=20) -
    X2, N2 = 128, 20
    x_fit2 = jax.random.normal(ks[3], (256, X2), dtype=jnp.float32)
    z_fit2 = jax.random.normal(ks[4], (256, Z_DIM), dtype=jnp.float32)
    mean2, P2 = fit_leace_stats(np.array(x_fit2), np.array(z_fit2))
    params2 = prepare_concept_eraser(jnp.asarray(mean2), jnp.asarray(P2))  # one-time prep
    xb = jax.random.normal(ks[5], (N2, X2), dtype=jnp.float32)
    out2 = jax.block_until_ready(concept_eraser_apply(xb, params2))
    xb64 = np.asarray(xb, np.float64)
    ref2 = (xb64 - mean2.astype(np.float64)[None]) @ P2.astype(np.float64).T \
        + mean2.astype(np.float64)[None]
    np.testing.assert_allclose(np.asarray(out2, np.float64), ref2,
                               rtol=1e-4, atol=1e-4)

    # ---- Test 3: d=192 (pads to 256), bf16 compute, n=64 -------------------
    X3, N3 = 192, 64
    x_fit3 = jax.random.normal(ks[6], (256, X3), dtype=jnp.float32)
    z_fit3 = jax.random.normal(ks[7], (256, Z_DIM), dtype=jnp.float32)
    mean3, P3 = fit_leace_stats(np.array(x_fit3), np.array(z_fit3))
    params3 = prepare_concept_eraser(jnp.asarray(mean3), jnp.asarray(P3),
                                     compute_dtype=jnp.bfloat16)
    xc = jax.random.normal(ks[8], (N3, X3), dtype=jnp.float32)
    out3 = jax.block_until_ready(concept_eraser_apply(xc, params3))
    xq = np.asarray(xc.astype(jnp.bfloat16)).astype(np.float64)
    ptq = np.asarray(jnp.asarray(P3.T).astype(jnp.bfloat16)).astype(np.float64)
    mu3 = mean3.astype(np.float64)[None]
    bias3 = mu3 - mu3 @ P3.astype(np.float64).T
    ref3 = xq @ ptq + bias3
    np.testing.assert_allclose(np.asarray(out3, np.float64), ref3,
                               rtol=2e-2, atol=2e-2)

    # ---- Test 4: K-tiled fallback path (forced), d=384, n=40 ---------------
    X4, N4 = 384, 40
    x_fit4 = jax.random.normal(ks[9], (512, X4), dtype=jnp.float32)
    z_fit4 = jax.random.normal(ks[10], (512, Z_DIM), dtype=jnp.float32)
    mean4, P4 = fit_leace_stats(np.array(x_fit4), np.array(z_fit4))
    params4 = prepare_concept_eraser(jnp.asarray(mean4), jnp.asarray(P4))
    xd = jax.random.normal(ks[11], (N4, X4), dtype=jnp.float32)
    out4 = jax.block_until_ready(
        concept_eraser_apply(xd, params4, force_ktiled=True))
    xd64 = np.asarray(xd, np.float64)
    ref4 = (xd64 - mean4.astype(np.float64)[None]) @ P4.astype(np.float64).T \
        + mean4.astype(np.float64)[None]
    np.testing.assert_allclose(np.asarray(out4, np.float64), ref4,
                               rtol=1e-4, atol=1e-4)

    print("KERNEL_OK")
</pallas_src>

<mosaic_0001>
module attributes {stable_mosaic.version = 11 : i64} {
  func.func @_eraser_kernel_resident(%arg0: i32, %arg1: memref<8x128xf32, #tpu.memory_space<vmem>>, %arg2: memref<1x128xf32, #tpu.memory_space<vmem>>, %arg3: memref<128x128xf32, #tpu.memory_space<vmem>>, %arg4: memref<8x128xf32, #tpu.memory_space<vmem>>) attributes {dimension_semantics = [#tpu.dimension_semantics<parallel>], iteration_bounds = array<i64: 1>, scalar_prefetch = 0 : i64, scratch_operands = 0 : i64, tpu.core_type = #tpu.core_type<tc>, window_params = [{transform_indices = @transform_0, window_bounds = array<i64: 8, 128>}, {pipeline_mode = #tpu.pipeline_mode<synchronous>, transform_indices = @transform_1, window_bounds = array<i64: 1, 128>}, {pipeline_mode = #tpu.pipeline_mode<synchronous>, transform_indices = @transform_2, window_bounds = array<i64: 128, 128>}, {transform_indices = @transform_3, window_bounds = array<i64: 8, 128>}]} {
    %c0 = arith.constant 0 : index
    %c0_0 = arith.constant 0 : index
    %0 = vector.load %arg1[%c0, %c0_0] : memref<8x128xf32, #tpu.memory_space<vmem>>, vector<8x128xf32>
    %c0_1 = arith.constant 0 : index
    %c0_2 = arith.constant 0 : index
    %1 = vector.load %arg3[%c0_1, %c0_2] : memref<128x128xf32, #tpu.memory_space<vmem>>, vector<128x128xf32>
    %cst = arith.constant dense<0.000000e+00> : vector<8x128xf32>
    %2 = tpu.matmul %0, %1, %cst {dimension_numbers = #tpu.dot_dimension_numbers<[1], [0], [0], [1], [0, 0, 1, 1], [], []>} : vector<8x128xf32>, vector<128x128xf32>, vector<8x128xf32> -> vector<8x128xf32>
    %c0_3 = arith.constant 0 : index
    %c0_4 = arith.constant 0 : index
    %3 = vector.load %arg2[%c0_3, %c0_4] : memref<1x128xf32, #tpu.memory_space<vmem>>, vector<1x128xf32>
    %4 = vector.broadcast %3 : vector<1x128xf32> to vector<8x128xf32>
    %5 = arith.addf %2, %4 : vector<8x128xf32>
    %c0_5 = arith.constant 0 : index
    %c0_6 = arith.constant 0 : index
    %6 = vector.load %arg4[%c0_5, %c0_6] : memref<8x128xf32, #tpu.memory_space<vmem>>, vector<8x128xf32>
    tpu.vector_store %arg4[%c0_5, %c0_6], %5 {strides = array<i32>} : memref<8x128xf32, #tpu.memory_space<vmem>>, vector<8x128xf32>,
    return
  }
  func.func @transform_0(%arg0: i32) -> (i32, i32) {
    %c0_i32 = arith.constant 0 : i32
    %c0_i32_0 = arith.constant 0 : i32
    return %arg0, %c0_i32 : i32, i32
  }
  func.func @transform_1(%arg0: i32) -> (i32, i32) {
    %c0_i32 = arith.constant 0 : i32
    %c0_i32_0 = arith.constant 0 : i32
    %c0_i32_1 = arith.constant 0 : i32
    return %c0_i32, %c0_i32_0 : i32, i32
  }
  func.func @transform_2(%arg0: i32) -> (i32, i32) {
    %c0_i32 = arith.constant 0 : i32
    %c0_i32_0 = arith.constant 0 : i32
    %c0_i32_1 = arith.constant 0 : i32
    return %c0_i32, %c0_i32_0 : i32, i32
  }
  func.func @transform_3(%arg0: i32) -> (i32, i32) {
    %c0_i32 = arith.constant 0 : i32
    %c0_i32_0 = arith.constant 0 : i32
    return %arg0, %c0_i32 : i32, i32
  }
}

module attributes {stable_mosaic.version = 11 : i64} {
  func.func @_eraser_kernel_resident(%arg0: i32, %arg1: memref<8x128xf32, #tpu.memory_space<vmem>>, %arg2: memref<1x128xf32, #tpu.memory_space<vmem>>, %arg3: memref<128x128xf32, #tpu.memory_space<vmem>>, %arg4: memref<8x128xf32, #tpu.memory_space<vmem>>) attributes {dimension_semantics = [#tpu.dimension_semantics<parallel>], iteration_bounds = array<i64: 1>, scalar_prefetch = 0 : i64, scratch_operands = 0 : i64, tpu.core_type = #tpu.core_type<tc>, window_params = [{transform_indices = @transform_0, window_bounds = array<i64: 8, 128>}, {pipeline_mode = #tpu.pipeline_mode<synchronous>, transform_indices = @transform_1, window_bounds = array<i64: 1, 128>}, {pipeline_mode = #tpu.pipeline_mode<synchronous>, transform_indices = @transform_2, window_bounds = array<i64: 128, 128>}, {transform_indices = @transform_3, window_bounds = array<i64: 8, 128>}]} {
    %c0 = arith.constant 0 : index
    %c0_0 = arith.constant 0 : index
    %0 = vector.load %arg1[%c0, %c0_0] : memref<8x128xf32, #tpu.memory_space<vmem>>, vector<8x128xf32>
    %c0_1 = arith.constant 0 : index
    %c0_2 = arith.constant 0 : index
    %1 = vector.load %arg3[%c0_1, %c0_2] : memref<128x128xf32, #tpu.memory_space<vmem>>, vector<128x128xf32>
    %cst = arith.constant dense<0.000000e+00> : vector<8x128xf32>
    %2 = tpu.matmul %0, %1, %cst {dimension_numbers = #tpu.dot_dimension_numbers<[1], [0], [0], [1], [0, 0, 1, 1], [], []>} : vector<8x128xf32>, vector<128x128xf32>, vector<8x128xf32> -> vector<8x128xf32>
    %c0_3 = arith.constant 0 : index
    %c0_4 = arith.constant 0 : index
    %3 = vector.load %arg2[%c0_3, %c0_4] : memref<1x128xf32, #tpu.memory_space<vmem>>, vector<1x128xf32>
    %4 = vector.broadcast %3 : vector<1x128xf32> to vector<8x128xf32>
    %5 = arith.addf %2, %4 : vector<8x128xf32>
    %c0_5 = arith.constant 0 : index
    %c0_6 = arith.constant 0 : index
    %6 = vector.load %arg4[%c0_5, %c0_6] : memref<8x128xf32, #tpu.memory_space<vmem>>, vector<8x128xf32>
    tpu.vector_store %arg4[%c0_5, %c0_6], %5 {strides = array<i32>} : memref<8x128xf32, #tpu.memory_space<vmem>>, vector<8x128xf32>,
    return
  }
  func.func @transform_0(%arg0: i32) -> (i32, i32) {
    %c0_i32 = arith.constant 0 : i32
    %c0_i32_0 = arith.constant 0 : i32
    return %arg0, %c0_i32 : i32, i32
  }
  func.func @transform_1(%arg0: i32) -> (i32, i32) {
    %c0_i32 = arith.constant 0 : i32
    %c0_i32_0 = arith.constant 0 : i32
    %c0_i32_1 = arith.constant 0 : i32
    return %c0_i32, %c0_i32_0 : i32, i32
  }
  func.func @transform_2(%arg0: i32) -> (i32, i32) {
    %c0_i32 = arith.constant 0 : i32
    %c0_i32_0 = arith.constant 0 : i32
    %c0_i32_1 = arith.constant 0 : i32
    return %c0_i32, %c0_i32_0 : i32, i32
  }
  func.func @transform_3(%arg0: i32) -> (i32, i32) {
    %c0_i32 = arith.constant 0 : i32
    %c0_i32_0 = arith.constant 0 : i32
    return %arg0, %c0_i32 : i32, i32
  }
}

</mosaic_0001>

<llo_original>
// kernel: tpu_custom_call.1
$region0: #{tpu_custom_call.1}
  #allocation0 [shape = 'u32[]', space=smem, size = 0x4, offset = 0x4, fixed_abs, tag = 'smem constant byte address 0x4 - core index']
  #allocation1 [shape = 'u32[72,128]{1,0:T(1,128)}', space=vmem, size = 0x9000, scoped, tag = 'internal scratch']
  %s0 = inlined_call_operand.hbm [shape: f32[8,128], index: 0, kind: input, shape index: {}]
  %s1 = inlined_call_operand.hbm [shape: f32[1,128], index: 1, kind: input, shape index: {}]
  %s2 = inlined_call_operand.hbm [shape: f32[128,128], index: 2, kind: input, shape index: {}]
  %s3 = inlined_call_operand.hbm [shape: f32[8,128], index: 3, kind: output, shape index: {}]
  %s4 = sld [smem:[#allocation0]]
  $region34: #{tpu_custom_call.1} parent=0
    _
  %s6 = ssub.s32 1, %s4
  %s7 = scalar_select 0, %s6, %s4
  $region1: #{tpu_custom_call.1} parent=0
    #allocation2 [shape = 'u8[4096]{0}', space=vmem, size = 0x1000, scoped, tag = 'input window, operand 0, single buffered']
    #allocation3 [shape = 's32[1]{0}', space=sflag, size = 0x4, scoped, tag = 'scoped memory for tpu_custom_call.1']
    #allocation4 [shape = 's32[1]{0}', space=sflag, size = 0x4, scoped, tag = 'scoped memory for tpu_custom_call.1']
    #allocation5 [shape = 'u8[512]{0}', space=vmem, size = 0x400, scoped, tag = 'input window, operand 1, single buffered']
    #allocation6 [shape = 's32[1]{0}', space=sflag, size = 0x4, scoped, tag = 'scoped memory for tpu_custom_call.1']
    #allocation7 [shape = 'u8[65536]{0}', space=vmem, size = 0x10000, scoped, tag = 'input window, operand 2, single buffered']
    #allocation8 [shape = 'u8[4096]{0}', space=vmem, size = 0x1000, scoped, tag = 'output window, operand 0, single buffered']
    %8 = vsyncpa [#allocation3], 0
    %9 = vsyncpa [#allocation6], 0
    %10 = vsyncpa [#allocation4], 0
    // Predicated region
    $region2: #{tpu_custom_call.1} parent=1 // pred_check
      _
    $region3: #{tpu_custom_call.1} parent=1 // pred_check_branch
      %12 = sbr.rel (0) target = $region5
    $region4: #{tpu_custom_call.1} parent=1 // pred_region
      %14 = vsyncadd [#allocation3], 0
      %s16 = sshll.u32 %s0, 4
      %s17 = int_to_ptr.hbm [resolvable:$true] %s16
      %s18 = sshll.u32 [#allocation2], 4
      %s19 = int_to_ptr.vmem [resolvable:$true] %s18
      %21 = dma.hbm_to_vmem [thread:$0]  %s17, 128, %s19, [#allocation3]
    $region5: #{tpu_custom_call.1} parent=1 // pred_fallthru
      _
    // Predicated region
    $region6: #{tpu_custom_call.1} parent=1 // pred_check
      _
    $region7: #{tpu_custom_call.1} parent=1 // pred_check_branch
      %23 = sbr.rel (0) target = $region9
    $region8: #{tpu_custom_call.1} parent=1 // pred_region
      %25 = vsyncadd [#allocation6], 0
      %s27 = sshll.u32 %s1, 4
      %s28 = int_to_ptr.hbm [resolvable:$true] %s27
      %s29 = sshll.u32 [#allocation5], 4
      %s30 = int_to_ptr.vmem [resolvable:$true] %s29
      %32 = dma.hbm_to_vmem [thread:$0]  %s28, 16, %s30, [#allocation6]
    $region9: #{tpu_custom_call.1} parent=1 // pred_fallthru
      _
    // Predicated region
    $region10: #{tpu_custom_call.1} parent=1 // pred_check
      _
    $region11: #{tpu_custom_call.1} parent=1 // pred_check_branch
      %34 = sbr.rel (0) target = $region13
    $region12: #{tpu_custom_call.1} parent=1 // pred_region
      %36 = vsyncadd [#allocation6], 0
      %s37 = sshll.u32 %s2, 4
      %s38 = int_to_ptr.hbm [resolvable:$true] %s37
      %s39 = sshll.u32 [#allocation7], 4
      %s40 = int_to_ptr.vmem [resolvable:$true] %s39
      %45 = dma.hbm_to_vmem [thread:$0]  %s38, 2048, %s40, [#allocation6], 128, 128, 8
    $region13: #{tpu_custom_call.1} parent=1 // pred_fallthru
      _
    // Predicated region
    $region14: #{tpu_custom_call.1} parent=1 // pred_check
      _
    $region15: #{tpu_custom_call.1} parent=1 // pred_check_branch
      %47 = sbr.rel (0) target = $region17
    $region16: #{tpu_custom_call.1} parent=1 // pred_region
      %49 = dma.done [#allocation3], 128
    $region17: #{tpu_custom_call.1} parent=1 // pred_fallthru
      _
    // Predicated region
    $region18: #{tpu_custom_call.1} parent=1 // pred_check
      _
    $region19: #{tpu_custom_call.1} parent=1 // pred_check_branch
      %51 = sbr.rel (0) target = $region21
    $region20: #{tpu_custom_call.1} parent=1 // pred_region
      %53 = dma.done [#allocation6], 16
    $region21: #{tpu_custom_call.1} parent=1 // pred_fallthru
      _
    // Predicated region
    $region22: #{tpu_custom_call.1} parent=1 // pred_check
      _
    $region23: #{tpu_custom_call.1} parent=1 // pred_check_branch
      %55 = sbr.rel (0) target = $region25
    $region24: #{tpu_custom_call.1} parent=1 // pred_region
      %57 = dma.done [#allocation6], 2048
    $region25: #{tpu_custom_call.1} parent=1 // pred_fallthru
      _
    %v58 = vld [vmem:[#allocation2] sm:$0xff]
    %v59 = vld [vmem:[#allocation7] sm:$0xff]
    %v60 = vld [vmem:[#allocation7 + $0x8] sm:$0xff]
    %v61 = vld [vmem:[#allocation7 + $0x10] sm:$0xff]
    %v62 = vld [vmem:[#allocation7 + $0x18] sm:$0xff]
    %v63 = vld [vmem:[#allocation7 + $0x20] sm:$0xff]
    %v64 = vld [vmem:[#allocation7 + $0x28] sm:$0xff]
    %v65 = vld [vmem:[#allocation7 + $0x30] sm:$0xff]
    %v66 = vld [vmem:[#allocation7 + $0x38] sm:$0xff]
    %v67 = vld [vmem:[#allocation7 + $0x40] sm:$0xff]
    %v68 = vld [vmem:[#allocation7 + $0x48] sm:$0xff]
    %v69 = vld [vmem:[#allocation7 + $0x50] sm:$0xff]
    %v70 = vld [vmem:[#allocation7 + $0x58] sm:$0xff]
    %v71 = vld [vmem:[#allocation7 + $0x60] sm:$0xff]
    %v72 = vld [vmem:[#allocation7 + $0x68] sm:$0xff]
    %v73 = vld [vmem:[#allocation7 + $0x70] sm:$0xff]
    %v74 = vld [vmem:[#allocation7 + $0x78] sm:$0xff]
    %v75 = vld [vmem:[#allocation5] sm:$0x1]
    %v77 = vperm.slane %v75, 0
    %79 = vmatpush.msra.mxu0 %v74
    %80 = vmatpush.msra.mxu0 %v73
    %81 = vmatpush.msra.mxu0 %v72
    %82 = vmatpush.msra.mxu0 %v71
    %83 = vmatpush.msra.mxu0 %v70
    %84 = vmatpush.msra.mxu0 %v69
    %85 = vmatpush.msra.mxu0 %v68
    %86 = vmatpush.msra.mxu0 %v67
    %87 = vmatpush.msra.mxu0 %v66
    %88 = vmatpush.msra.mxu0 %v65
    %89 = vmatpush.msra.mxu0 %v64
    %90 = vmatpush.msra.mxu0 %v63
    %91 = vmatpush.msra.mxu0 %v62
    %92 = vmatpush.msra.mxu0 %v61
    %93 = vmatpush.msra.mxu0 %v60
    %94 = vmatpush.msra.mxu0 %v59
    %95 = vmatmul.f32.gmra.mxu0 %v58
    %v96 = vpop.f32.mrf.mxu0
    %v97 = vadd.f32 %v77, %v96
    %98 = vdwg.mxu0
    %99 = vst [vmem:[#allocation8] sm:$0xff] %v97
    // Predicated region
    $region26: #{tpu_custom_call.1} parent=1 // pred_check
      _
    $region27: #{tpu_custom_call.1} parent=1 // pred_check_branch
      %101 = sbr.rel (0) target = $region29
    $region28: #{tpu_custom_call.1} parent=1 // pred_region
      %103 = vsyncadd [#allocation4], 0
      %s105 = sshll.u32 [#allocation8], 4
      %s106 = int_to_ptr.vmem [resolvable:$true] %s105
      %s107 = sshll.u32 %s3, 4
      %s108 = int_to_ptr.hbm [resolvable:$true] %s107
      %110 = dma.vmem_to_hbm [thread:$0]  %s106, 128, %s108, [#allocation4]
    $region29: #{tpu_custom_call.1} parent=1 // pred_fallthru
      _
    // Predicated region
    $region30: #{tpu_custom_call.1} parent=1 // pred_check
      _
    $region31: #{tpu_custom_call.1} parent=1 // pred_check_branch
      %112 = sbr.rel (0) target = $region33
    $region32: #{tpu_custom_call.1} parent=1 // pred_region
      %114 = dma.done [#allocation4], 128
    $region33: #{tpu_custom_call.1} parent=1 // pred_fallthru
      _
    %115 = vsyncpa [#allocation3], 1
    %116 = vsyncpa [#allocation6], 1
    %117 = vsyncpa [#allocation4], 1

// kernel: tpu_custom_call.1
$region0: #{tpu_custom_call.1}
  #allocation0 [shape = 'u32[]', space=smem, size = 0x4, offset = 0x4, fixed_abs, tag = 'smem constant byte address 0x4 - core index']
  #allocation1 [shape = 'u32[72,128]{1,0:T(1,128)}', space=vmem, size = 0x9000, scoped, tag = 'internal scratch']
  %s0 = inlined_call_operand.hbm [shape: f32[8,128], index: 0, kind: input, shape index: {}]
  %s1 = inlined_call_operand.hbm [shape: f32[1,128], index: 1, kind: input, shape index: {}]
  %s2 = inlined_call_operand.hbm [shape: f32[128,128], index: 2, kind: input, shape index: {}]
  %s3 = inlined_call_operand.hbm [shape: f32[8,128], index: 3, kind: output, shape index: {}]
  %s4 = sld [smem:[#allocation0]]
  $region34: #{tpu_custom_call.1} parent=0
    _
  %s6 = ssub.s32 1, %s4
  %s7 = scalar_select 0, %s6, %s4
  $region1: #{tpu_custom_call.1} parent=0
    #allocation2 [shape = 'u8[4096]{0}', space=vmem, size = 0x1000, scoped, tag = 'input window, operand 0, single buffered']
    #allocation3 [shape = 's32[1]{0}', space=sflag, size = 0x4, scoped, tag = 'scoped memory for tpu_custom_call.1']
    #allocation4 [shape = 's32[1]{0}', space=sflag, size = 0x4, scoped, tag = 'scoped memory for tpu_custom_call.1']
    #allocation5 [shape = 'u8[512]{0}', space=vmem, size = 0x400, scoped, tag = 'input window, operand 1, single buffered']
    #allocation6 [shape = 's32[1]{0}', space=sflag, size = 0x4, scoped, tag = 'scoped memory for tpu_custom_call.1']
    #allocation7 [shape = 'u8[65536]{0}', space=vmem, size = 0x10000, scoped, tag = 'input window, operand 2, single buffered']
    #allocation8 [shape = 'u8[4096]{0}', space=vmem, size = 0x1000, scoped, tag = 'output window, operand 0, single buffered']
    %8 = vsyncpa [#allocation3], 0
    %9 = vsyncpa [#allocation6], 0
    %10 = vsyncpa [#allocation4], 0
    // Predicated region
    $region2: #{tpu_custom_call.1} parent=1 // pred_check
      _
    $region3: #{tpu_custom_call.1} parent=1 // pred_check_branch
      %12 = sbr.rel (0) target = $region5
    $region4: #{tpu_custom_call.1} parent=1 // pred_region
      %14 = vsyncadd [#allocation3], 0
      %s16 = sshll.u32 %s0, 4
      %s17 = int_to_ptr.hbm [resolvable:$true] %s16
      %s18 = sshll.u32 [#allocation2], 4
      %s19 = int_to_ptr.vmem [resolvable:$true] %s18
      %21 = dma.hbm_to_vmem [thread:$0]  %s17, 128, %s19, [#allocation3]
    $region5: #{tpu_custom_call.1} parent=1 // pred_fallthru
      _
    // Predicated region
    $region6: #{tpu_custom_call.1} parent=1 // pred_check
      _
    $region7: #{tpu_custom_call.1} parent=1 // pred_check_branch
      %23 = sbr.rel (0) target = $region9
    $region8: #{tpu_custom_call.1} parent=1 // pred_region
      %25 = vsyncadd [#allocation6], 0
      %s27 = sshll.u32 %s1, 4
      %s28 = int_to_ptr.hbm [resolvable:$true] %s27
      %s29 = sshll.u32 [#allocation5], 4
      %s30 = int_to_ptr.vmem [resolvable:$true] %s29
      %32 = dma.hbm_to_vmem [thread:$0]  %s28, 16, %s30, [#allocation6]
    $region9: #{tpu_custom_call.1} parent=1 // pred_fallthru
      _
    // Predicated region
    $region10: #{tpu_custom_call.1} parent=1 // pred_check
      _
    $region11: #{tpu_custom_call.1} parent=1 // pred_check_branch
      %34 = sbr.rel (0) target = $region13
    $region12: #{tpu_custom_call.1} parent=1 // pred_region
      %36 = vsyncadd [#allocation6], 0
      %s37 = sshll.u32 %s2, 4
      %s38 = int_to_ptr.hbm [resolvable:$true] %s37
      %s39 = sshll.u32 [#allocation7], 4
      %s40 = int_to_ptr.vmem [resolvable:$true] %s39
      %45 = dma.hbm_to_vmem [thread:$0]  %s38, 2048, %s40, [#allocation6], 128, 128, 8
    $region13: #{tpu_custom_call.1} parent=1 // pred_fallthru
      _
    // Predicated region
    $region14: #{tpu_custom_call.1} parent=1 // pred_check
      _
    $region15: #{tpu_custom_call.1} parent=1 // pred_check_branch
      %47 = sbr.rel (0) target = $region17
    $region16: #{tpu_custom_call.1} parent=1 // pred_region
      %49 = dma.done [#allocation3], 128
    $region17: #{tpu_custom_call.1} parent=1 // pred_fallthru
      _
    // Predicated region
    $region18: #{tpu_custom_call.1} parent=1 // pred_check
      _
    $region19: #{tpu_custom_call.1} parent=1 // pred_check_branch
      %51 = sbr.rel (0) target = $region21
    $region20: #{tpu_custom_call.1} parent=1 // pred_region
      %53 = dma.done [#allocation6], 16
    $region21: #{tpu_custom_call.1} parent=1 // pred_fallthru
      _
    // Predicated region
    $region22: #{tpu_custom_call.1} parent=1 // pred_check
      _
    $region23: #{tpu_custom_call.1} parent=1 // pred_check_branch
      %55 = sbr.rel (0) target = $region25
    $region24: #{tpu_custom_call.1} parent=1 // pred_region
      %57 = dma.done [#allocation6], 2048
    $region25: #{tpu_custom_call.1} parent=1 // pred_fallthru
      _
    %v58 = vld [vmem:[#allocation2] sm:$0xff]
    %v59 = vld [vmem:[#allocation7] sm:$0xff]
    %v60 = vld [vmem:[#allocation7 + $0x8] sm:$0xff]
    %v61 = vld [vmem:[#allocation7 + $0x10] sm:$0xff]
    %v62 = vld [vmem:[#allocation7 + $0x18] sm:$0xff]
    %v63 = vld [vmem:[#allocation7 + $0x20] sm:$0xff]
    %v64 = vld [vmem:[#allocation7 + $0x28] sm:$0xff]
    %v65 = vld [vmem:[#allocation7 + $0x30] sm:$0xff]
    %v66 = vld [vmem:[#allocation7 + $0x38] sm:$0xff]
    %v67 = vld [vmem:[#allocation7 + $0x40] sm:$0xff]
    %v68 = vld [vmem:[#allocation7 + $0x48] sm:$0xff]
    %v69 = vld [vmem:[#allocation7 + $0x50] sm:$0xff]
    %v70 = vld [vmem:[#allocation7 + $0x58] sm:$0xff]
    %v71 = vld [vmem:[#allocation7 + $0x60] sm:$0xff]
    %v72 = vld [vmem:[#allocation7 + $0x68] sm:$0xff]
    %v73 = vld [vmem:[#allocation7 + $0x70] sm:$0xff]
    %v74 = vld [vmem:[#allocation7 + $0x78] sm:$0xff]
    %v75 = vld [vmem:[#allocation5] sm:$0x1]
    %v77 = vperm.slane %v75, 0
    %79 = vmatpush.msra.mxu0 %v74
    %80 = vmatpush.msra.mxu0 %v73
    %81 = vmatpush.msra.mxu0 %v72
    %82 = vmatpush.msra.mxu0 %v71
    %83 = vmatpush.msra.mxu0 %v70
    %84 = vmatpush.msra.mxu0 %v69
    %85 = vmatpush.msra.mxu0 %v68
    %86 = vmatpush.msra.mxu0 %v67
    %87 = vmatpush.msra.mxu0 %v66
    %88 = vmatpush.msra.mxu0 %v65
    %89 = vmatpush.msra.mxu0 %v64
    %90 = vmatpush.msra.mxu0 %v63
    %91 = vmatpush.msra.mxu0 %v62
    %92 = vmatpush.msra.mxu0 %v61
    %93 = vmatpush.msra.mxu0 %v60
    %94 = vmatpush.msra.mxu0 %v59
    %95 = vmatmul.f32.gmra.mxu0 %v58
    %v96 = vpop.f32.mrf.mxu0
    %v97 = vadd.f32 %v77, %v96
    %98 = vdwg.mxu0
    %99 = vst [vmem:[#allocation8] sm:$0xff] %v97
    // Predicated region
    $region26: #{tpu_custom_call.1} parent=1 // pred_check
      _
    $region27: #{tpu_custom_call.1} parent=1 // pred_check_branch
      %101 = sbr.rel (0) target = $region29
    $region28: #{tpu_custom_call.1} parent=1 // pred_region
      %103 = vsyncadd [#allocation4], 0
      %s105 = sshll.u32 [#allocation8], 4
      %s106 = int_to_ptr.vmem [resolvable:$true] %s105
      %s107 = sshll.u32 %s3, 4
      %s108 = int_to_ptr.hbm [resolvable:$true] %s107
      %110 = dma.vmem_to_hbm [thread:$0]  %s106, 128, %s108, [#allocation4]
    $region29: #{tpu_custom_call.1} parent=1 // pred_fallthru
      _
    // Predicated region
    $region30: #{tpu_custom_call.1} parent=1 // pred_check
      _
    $region31: #{tpu_custom_call.1} parent=1 // pred_check_branch
      %112 = sbr.rel (0) target = $region33
    $region32: #{tpu_custom_call.1} parent=1 // pred_region
      %114 = dma.done [#allocation4], 128
    $region33: #{tpu_custom_call.1} parent=1 // pred_fallthru
      _
    %115 = vsyncpa [#allocation3], 1
    %116 = vsyncpa [#allocation6], 1
    %117 = vsyncpa [#allocation4], 1

</llo_original>
